<compile_context>
chip_gen: v7x
topology: tpu7x:2x2x1
jax: 0.10.0
libtpu: 0.0.40
codegen_flags: <defaults>
</compile_context>

<pallas_src>
import jax
import jax.numpy as jnp
from jax.experimental import pallas as pl
from jax.experimental.pallas import tpu as pltpu


def _deepset_kernel(x_ref, w1_ref, b1_ref, w2_ref, b2_ref, o_ref):
    # x_ref: (TB, S, H) block -- TB batch elements' set tiles for this step.
    TB, S, H = x_ref.shape
    x = x_ref[...].reshape(TB * S, H)              # one big MXU slab

    # Linear 1 + ReLU  (MXU matmul, f32 accumulate; bias (1, H) broadcasts)
    h1 = jnp.dot(x, w1_ref[...], preferred_element_type=jnp.float32)
    h1 = jnp.maximum(h1 + b1_ref[...], 0.0)

    # Linear 2 + ReLU
    h2 = jnp.dot(h1, w2_ref[...], preferred_element_type=jnp.float32)
    h2 = jnp.maximum(h2 + b2_ref[...], 0.0)

    # DeepSet pooling: max over the set axis (S), per batch element.
    pooled = jnp.max(h2.reshape(TB, S, H), axis=1)       # (TB, H)
    o_ref[...] = pooled.astype(o_ref.dtype)


def deepset_encoder(states, w1, b1, w2, b2, *, block_b=32):
    """states: (B, S, H) f32.  w1, w2: (H, H) PyTorch-layout (out, in).  b*: (H,).

    block_b: batch elements per grid step.  block_b * S should be a multiple of
    256 for v6e/v7x MXU fill (128 suffices on v5e).  Default 32 (256 rows at S=8).
    """
    B, S, H = states.shape
    TB = block_b
    num_blocks = pl.cdiv(B, TB)
    B_pad = num_blocks * TB
    if B_pad != B:
        # Zero-pad the batch; padded rows produce bias-only garbage that is
        # sliced off below (no masking cost in the hot loop).
        states = jnp.pad(states, ((0, B_pad - B), (0, 0), (0, 0)))

    w1_t = w1.T                                    # kernel computes x @ W.T
    w2_t = w2.T
    b1_2d = b1.reshape(1, H)
    b2_2d = b2.reshape(1, H)

    out = pl.pallas_call(
        _deepset_kernel,
        out_shape=jax.ShapeDtypeStruct((B_pad, H), states.dtype),
        grid_spec=pltpu.PrefetchScalarGridSpec(
            num_scalar_prefetch=0,
            grid=(num_blocks,),
            in_specs=[
                pl.BlockSpec((TB, S, H), lambda b: (b, 0, 0)),  # TB set tiles
                pl.BlockSpec((H, H), lambda b: (0, 0)),         # W1^T (resident)
                pl.BlockSpec((1, H), lambda b: (0, 0)),         # b1
                pl.BlockSpec((H, H), lambda b: (0, 0)),         # W2^T (resident)
                pl.BlockSpec((1, H), lambda b: (0, 0)),         # b2
            ],
            out_specs=pl.BlockSpec((TB, H), lambda b: (b, 0)),  # sublane-dense
        ),
        compiler_params=pltpu.CompilerParams(
            dimension_semantics=("parallel",),
        ),
        cost_estimate=pl.CostEstimate(
            flops=4 * B_pad * S * H * H,            # two (rows x H x H) matmuls
            transcendentals=0,
            bytes_accessed=(B_pad * S * H * 4       # states in
                            + 2 * H * H * 4         # weights
                            + 2 * H * 4             # biases
                            + B_pad * H * 4),       # pooled out
        ),
    )(states, w1_t, b1_2d, w2_t, b2_2d)

    return out[:B]


def _reference(states, w1, b1, w2, b2):
    h = jnp.maximum(jnp.einsum("bsh,oh->bso", states, w1) + b1, 0.0)
    h = jnp.maximum(jnp.einsum("bsh,oh->bso", h, w2) + b2, 0.0)
    return jnp.max(h, axis=1)


if __name__ == "__main__":
    S, H = 8, 128           # set size, hidden_dim (module default 128)
    key = jax.random.PRNGKey(0)
    k_x, k_w1, k_b1, k_w2, k_b2, k_x2 = jax.random.split(key, 6)

    # Deterministic synthetic parameters (nn.Linear-style uniform init bounds).
    bound = 1.0 / (H ** 0.5)
    w1 = jax.random.uniform(k_w1, (H, H), jnp.float32, -bound, bound)
    b1 = jax.random.uniform(k_b1, (H,), jnp.float32, -bound, bound)
    w2 = jax.random.uniform(k_w2, (H, H), jnp.float32, -bound, bound)
    b2 = jax.random.uniform(k_b2, (H,), jnp.float32, -bound, bound)

    # Small-batch case (pads up to one TB=32 block).
    B = 2
    states = jax.random.normal(k_x, (B, S, H), dtype=jnp.float32)
    out = jax.block_until_ready(deepset_encoder(states, w1, b1, w2, b2))
    ref = _reference(states, w1, b1, w2, b2)
    assert out.shape == (B, H)
    assert jnp.allclose(out, ref, atol=1e-5, rtol=1e-5)

    # Multi-block case with a ragged tail (50 -> padded 64, grid=2) to verify
    # block indexing + tail-padding slicing.
    B2 = 50
    states2 = jax.random.normal(k_x2, (B2, S, H), dtype=jnp.float32)
    out2 = jax.block_until_ready(deepset_encoder(states2, w1, b1, w2, b2))
    ref2 = _reference(states2, w1, b1, w2, b2)
    assert out2.shape == (B2, H)
    assert jnp.allclose(out2, ref2, atol=1e-5, rtol=1e-5)

    print("KERNEL_OK")
</pallas_src>

<mosaic_0001>
module attributes {stable_mosaic.version = 11 : i64} {
  func.func @_deepset_kernel(%arg0: i32, %arg1: memref<32x8x128xf32, #tpu.memory_space<vmem>>, %arg2: memref<128x128xf32, #tpu.memory_space<vmem>>, %arg3: memref<1x128xf32, #tpu.memory_space<vmem>>, %arg4: memref<128x128xf32, #tpu.memory_space<vmem>>, %arg5: memref<1x128xf32, #tpu.memory_space<vmem>>, %arg6: memref<32x128xf32, #tpu.memory_space<vmem>>) attributes {dimension_semantics = [#tpu.dimension_semantics<parallel>], iteration_bounds = array<i64: 1>, scalar_prefetch = 0 : i64, scratch_operands = 0 : i64, tpu.core_type = #tpu.core_type<tc>, window_params = [{transform_indices = @transform_0, window_bounds = array<i64: 32, 8, 128>}, {pipeline_mode = #tpu.pipeline_mode<synchronous>, transform_indices = @transform_1, window_bounds = array<i64: 128, 128>}, {pipeline_mode = #tpu.pipeline_mode<synchronous>, transform_indices = @transform_2, window_bounds = array<i64: 1, 128>}, {pipeline_mode = #tpu.pipeline_mode<synchronous>, transform_indices = @transform_3, window_bounds = array<i64: 128, 128>}, {pipeline_mode = #tpu.pipeline_mode<synchronous>, transform_indices = @transform_4, window_bounds = array<i64: 1, 128>}, {transform_indices = @transform_5, window_bounds = array<i64: 32, 128>}]} {
    %c0 = arith.constant 0 : index
    %c0_0 = arith.constant 0 : index
    %c0_1 = arith.constant 0 : index
    %0 = vector.load %arg1[%c0, %c0_0, %c0_1] : memref<32x8x128xf32, #tpu.memory_space<vmem>>, vector<32x8x128xf32>
    %1 = vector.shape_cast %0 : vector<32x8x128xf32> to vector<256x128xf32>
    %c0_2 = arith.constant 0 : index
    %c0_3 = arith.constant 0 : index
    %2 = vector.load %arg2[%c0_2, %c0_3] : memref<128x128xf32, #tpu.memory_space<vmem>>, vector<128x128xf32>
    %cst = arith.constant dense<0.000000e+00> : vector<256x128xf32>
    %3 = tpu.matmul %1, %2, %cst {dimension_numbers = #tpu.dot_dimension_numbers<[1], [0], [0], [1], [0, 0, 1, 1], [], []>} : vector<256x128xf32>, vector<128x128xf32>, vector<256x128xf32> -> vector<256x128xf32>
    %c0_4 = arith.constant 0 : index
    %c0_5 = arith.constant 0 : index
    %4 = vector.load %arg3[%c0_4, %c0_5] : memref<1x128xf32, #tpu.memory_space<vmem>>, vector<1x128xf32>
    %5 = vector.broadcast %4 : vector<1x128xf32> to vector<256x128xf32>
    %6 = arith.addf %3, %5 : vector<256x128xf32>
    %cst_6 = arith.constant 0.000000e+00 : f32
    %7 = vector.broadcast %cst_6 : f32 to vector<256x128xf32>
    %8 = arith.maximumf %6, %7 : vector<256x128xf32>
    %c0_7 = arith.constant 0 : index
    %c0_8 = arith.constant 0 : index
    %9 = vector.load %arg4[%c0_7, %c0_8] : memref<128x128xf32, #tpu.memory_space<vmem>>, vector<128x128xf32>
    %cst_9 = arith.constant dense<0.000000e+00> : vector<256x128xf32>
    %10 = tpu.matmul %8, %9, %cst_9 {dimension_numbers = #tpu.dot_dimension_numbers<[1], [0], [0], [1], [0, 0, 1, 1], [], []>} : vector<256x128xf32>, vector<128x128xf32>, vector<256x128xf32> -> vector<256x128xf32>
    %c0_10 = arith.constant 0 : index
    %c0_11 = arith.constant 0 : index
    %11 = vector.load %arg5[%c0_10, %c0_11] : memref<1x128xf32, #tpu.memory_space<vmem>>, vector<1x128xf32>
    %12 = vector.broadcast %11 : vector<1x128xf32> to vector<256x128xf32>
    %13 = arith.addf %10, %12 : vector<256x128xf32>
    %cst_12 = arith.constant 0.000000e+00 : f32
    %14 = vector.broadcast %cst_12 : f32 to vector<256x128xf32>
    %15 = arith.maximumf %13, %14 : vector<256x128xf32>
    %16 = vector.shape_cast %15 : vector<256x128xf32> to vector<32x8x128xf32>
    %cst_13 = arith.constant dense<0xFF800000> : vector<32x128xf32>
    %17 = vector.multi_reduction <maximumf>, %16, %cst_13 [1] : vector<32x8x128xf32> to vector<32x128xf32>
    %c0_14 = arith.constant 0 : index
    %c0_15 = arith.constant 0 : index
    %18 = vector.load %arg6[%c0_14, %c0_15] : memref<32x128xf32, #tpu.memory_space<vmem>>, vector<32x128xf32>
    tpu.vector_store %arg6[%c0_14, %c0_15], %17 {strides = array<i32>} : memref<32x128xf32, #tpu.memory_space<vmem>>, vector<32x128xf32>,
    return
  }
  func.func @transform_0(%arg0: i32) -> (i32, i32, i32) {
    %c0_i32 = arith.constant 0 : i32
    %c0_i32_0 = arith.constant 0 : i32
    %c0_i32_1 = arith.constant 0 : i32
    return %arg0, %c0_i32, %c0_i32_0 : i32, i32, i32
  }
  func.func @transform_1(%arg0: i32) -> (i32, i32) {
    %c0_i32 = arith.constant 0 : i32
    %c0_i32_0 = arith.constant 0 : i32
    %c0_i32_1 = arith.constant 0 : i32
    return %c0_i32, %c0_i32_0 : i32, i32
  }
  func.func @transform_2(%arg0: i32) -> (i32, i32) {
    %c0_i32 = arith.constant 0 : i32
    %c0_i32_0 = arith.constant 0 : i32
    %c0_i32_1 = arith.constant 0 : i32
    return %c0_i32, %c0_i32_0 : i32, i32
  }
  func.func @transform_3(%arg0: i32) -> (i32, i32) {
    %c0_i32 = arith.constant 0 : i32
    %c0_i32_0 = arith.constant 0 : i32
    %c0_i32_1 = arith.constant 0 : i32
    return %c0_i32, %c0_i32_0 : i32, i32
  }
  func.func @transform_4(%arg0: i32) -> (i32, i32) {
    %c0_i32 = arith.constant 0 : i32
    %c0_i32_0 = arith.constant 0 : i32
    %c0_i32_1 = arith.constant 0 : i32
    return %c0_i32, %c0_i32_0 : i32, i32
  }
  func.func @transform_5(%arg0: i32) -> (i32, i32) {
    %c0_i32 = arith.constant 0 : i32
    %c0_i32_0 = arith.constant 0 : i32
    return %arg0, %c0_i32 : i32, i32
  }
}

</mosaic_0001>

<llo_original>
// kernel: tpu_custom_call.1
$region0: #{tpu_custom_call.1}
  #allocation0 [shape = 'u32[]', space=smem, size = 0x4, offset = 0x4, fixed_abs, tag = 'smem constant byte address 0x4 - core index']
  #allocation1 [shape = 'u32[144,128]{1,0:T(1,128)}', space=vmem, size = 0x12000, scoped, tag = 'internal scratch']
  %s0 = inlined_call_operand.hbm [shape: f32[32,8,128], index: 0, kind: input, shape index: {}]
  %s1 = inlined_call_operand.hbm [shape: f32[128,128], index: 1, kind: input, shape index: {}]
  %s2 = inlined_call_operand.vmem [shape: f32[1,128], index: 2, kind: input, shape index: {}]
  %s3 = inlined_call_operand.hbm [shape: f32[128,128], index: 3, kind: input, shape index: {}]
  %s4 = inlined_call_operand.vmem [shape: f32[1,128], index: 4, kind: input, shape index: {}]
  %s5 = inlined_call_operand.hbm [shape: f32[32,128], index: 5, kind: output, shape index: {}]
  %s6 = sld [smem:[#allocation0]]
  $region42: #{tpu_custom_call.1} parent=0
    _
  %s8 = ssub.s32 1, %s6
  %s9 = scalar_select 0, %s8, %s6
  $region1: #{tpu_custom_call.1} parent=0
    #allocation2 [shape = 'u8[131072]{0}', space=vmem, size = 0x20000, scoped, tag = 'input window, operand 0, single buffered']
    #allocation3 [shape = 's32[1]{0}', space=sflag, size = 0x4, scoped, tag = 'scoped memory for tpu_custom_call.1']
    #allocation4 [shape = 's32[1]{0}', space=sflag, size = 0x4, scoped, tag = 'scoped memory for tpu_custom_call.1']
    #allocation5 [shape = 'u8[65536]{0}', space=vmem, size = 0x10000, scoped, tag = 'input window, operand 1, single buffered']
    #allocation6 [shape = 's32[1]{0}', space=sflag, size = 0x4, scoped, tag = 'scoped memory for tpu_custom_call.1']
    #allocation7 [shape = 'u8[65536]{0}', space=vmem, size = 0x10000, scoped, tag = 'input window, operand 3, single buffered']
    #allocation8 [shape = 'u8[16384]{0}', space=vmem, size = 0x4000, scoped, tag = 'output window, operand 0, single buffered']
    %10 = vsyncpa [#allocation3], 0
    %11 = vsyncpa [#allocation6], 0
    %12 = vsyncpa [#allocation4], 0
    // Predicated region
    $region2: #{tpu_custom_call.1} parent=1 // pred_check
      _
    $region3: #{tpu_custom_call.1} parent=1 // pred_check_branch
      %14 = sbr.rel (0) target = $region5
    $region4: #{tpu_custom_call.1} parent=1 // pred_region
      %s16 = ssub.s32 4096, 4096
      %17 = vsyncadd [#allocation3], %s16
      %s18 = sshll.u32 [#allocation2], 4
      %s19 = int_to_ptr.vmem [resolvable:$true] %s18
      %24 = dma.hbm_to_vmem [thread:$0]  %s0, 4096, %s19, [#allocation3], 128, 128, 8
    $region5: #{tpu_custom_call.1} parent=1 // pred_fallthru
      _
    // Predicated region
    $region6: #{tpu_custom_call.1} parent=1 // pred_check
      _
    $region7: #{tpu_custom_call.1} parent=1 // pred_check_branch
      %26 = sbr.rel (0) target = $region9
    $region8: #{tpu_custom_call.1} parent=1 // pred_region
      %s28 = ssub.s32 2048, 2048
      %29 = vsyncadd [#allocation6], %s28
      %s30 = sshll.u32 [#allocation5], 4
      %s31 = int_to_ptr.vmem [resolvable:$true] %s30
      %36 = dma.hbm_to_vmem [thread:$0]  %s1, 2048, %s31, [#allocation6], 128, 128, 8
    $region9: #{tpu_custom_call.1} parent=1 // pred_fallthru
      _
    // Predicated region
    $region10: #{tpu_custom_call.1} parent=1 // pred_check
      _
    $region11: #{tpu_custom_call.1} parent=1 // pred_check_branch
      %38 = sbr.rel (0) target = $region13
    $region12: #{tpu_custom_call.1} parent=1 // pred_region
      _
    $region13: #{tpu_custom_call.1} parent=1 // pred_fallthru
      _
    // Predicated region
    $region14: #{tpu_custom_call.1} parent=1 // pred_check
      _
    $region15: #{tpu_custom_call.1} parent=1 // pred_check_branch
      %40 = sbr.rel (0) target = $region17
    $region16: #{tpu_custom_call.1} parent=1 // pred_region
      %s42 = ssub.s32 2048, 2048
      %43 = vsyncadd [#allocation6], %s42
      %s44 = sshll.u32 [#allocation7], 4
      %s45 = int_to_ptr.vmem [resolvable:$true] %s44
      %50 = dma.hbm_to_vmem [thread:$0]  %s3, 2048, %s45, [#allocation6], 128, 128, 8
    $region17: #{tpu_custom_call.1} parent=1 // pred_fallthru
      _
    // Predicated region
    $region18: #{tpu_custom_call.1} parent=1 // pred_check
      _
    $region19: #{tpu_custom_call.1} parent=1 // pred_check_branch
      %52 = sbr.rel (0) target = $region21
    $region20: #{tpu_custom_call.1} parent=1 // pred_region
      _
    $region21: #{tpu_custom_call.1} parent=1 // pred_fallthru
      _
    // Predicated region
    $region22: #{tpu_custom_call.1} parent=1 // pred_check
      _
    $region23: #{tpu_custom_call.1} parent=1 // pred_check_branch
      %54 = sbr.rel (0) target = $region25
    $region24: #{tpu_custom_call.1} parent=1 // pred_region
      %55 = dma.done [#allocation3], 4096
    $region25: #{tpu_custom_call.1} parent=1 // pred_fallthru
      _
    // Predicated region
    $region26: #{tpu_custom_call.1} parent=1 // pred_check
      _
    $region27: #{tpu_custom_call.1} parent=1 // pred_check_branch
      %57 = sbr.rel (0) target = $region29
    $region28: #{tpu_custom_call.1} parent=1 // pred_region
      %58 = dma.done [#allocation6], 2048
    $region29: #{tpu_custom_call.1} parent=1 // pred_fallthru
      _
    // Predicated region
    $region30: #{tpu_custom_call.1} parent=1 // pred_check
      _
    $region31: #{tpu_custom_call.1} parent=1 // pred_check_branch
      %60 = sbr.rel (0) target = $region33
    $region32: #{tpu_custom_call.1} parent=1 // pred_region
      %61 = dma.done [#allocation6], 2048
    $region33: #{tpu_custom_call.1} parent=1 // pred_fallthru
      _
    %v62 = vld [vmem:[#allocation2] sm:$0xff]
    %v63 = vld [vmem:[#allocation2 + $0x8] sm:$0xff]
    %v64 = vld [vmem:[#allocation2 + $0x10] sm:$0xff]
    %v65 = vld [vmem:[#allocation2 + $0x18] sm:$0xff]
    %v66 = vld [vmem:[#allocation2 + $0x20] sm:$0xff]
    %v67 = vld [vmem:[#allocation2 + $0x28] sm:$0xff]
    %v68 = vld [vmem:[#allocation2 + $0x30] sm:$0xff]
    %v69 = vld [vmem:[#allocation2 + $0x38] sm:$0xff]
    %v70 = vld [vmem:[#allocation2 + $0x40] sm:$0xff]
    %v71 = vld [vmem:[#allocation2 + $0x48] sm:$0xff]
    %v72 = vld [vmem:[#allocation2 + $0x50] sm:$0xff]
    %v73 = vld [vmem:[#allocation2 + $0x58] sm:$0xff]
    %v74 = vld [vmem:[#allocation2 + $0x60] sm:$0xff]
    %v75 = vld [vmem:[#allocation2 + $0x68] sm:$0xff]
    %v76 = vld [vmem:[#allocation2 + $0x70] sm:$0xff]
    %v77 = vld [vmem:[#allocation2 + $0x78] sm:$0xff]
    %v78 = vld [vmem:[#allocation2 + $0x80] sm:$0xff]
    %v79 = vld [vmem:[#allocation2 + $0x88] sm:$0xff]
    %v80 = vld [vmem:[#allocation2 + $0x90] sm:$0xff]
    %v81 = vld [vmem:[#allocation2 + $0x98] sm:$0xff]
    %v82 = vld [vmem:[#allocation2 + $0xa0] sm:$0xff]
    %v83 = vld [vmem:[#allocation2 + $0xa8] sm:$0xff]
    %v84 = vld [vmem:[#allocation2 + $0xb0] sm:$0xff]
    %v85 = vld [vmem:[#allocation2 + $0xb8] sm:$0xff]
    %v86 = vld [vmem:[#allocation2 + $0xc0] sm:$0xff]
    %v87 = vld [vmem:[#allocation2 + $0xc8] sm:$0xff]
    %v88 = vld [vmem:[#allocation2 + $0xd0] sm:$0xff]
    %v89 = vld [vmem:[#allocation2 + $0xd8] sm:$0xff]
    %v90 = vld [vmem:[#allocation2 + $0xe0] sm:$0xff]
    %v91 = vld [vmem:[#allocation2 + $0xe8] sm:$0xff]
    %v92 = vld [vmem:[#allocation2 + $0xf0] sm:$0xff]
    %v93 = vld [vmem:[#allocation2 + $0xf8] sm:$0xff]
    %v94 = vld [vmem:[#allocation5] sm:$0xff]
    %v95 = vld [vmem:[#allocation5 + $0x8] sm:$0xff]
    %v96 = vld [vmem:[#allocation5 + $0x10] sm:$0xff]
    %v97 = vld [vmem:[#allocation5 + $0x18] sm:$0xff]
    %v98 = vld [vmem:[#allocation5 + $0x20] sm:$0xff]
    %v99 = vld [vmem:[#allocation5 + $0x28] sm:$0xff]
    %v100 = vld [vmem:[#allocation5 + $0x30] sm:$0xff]
    %v101 = vld [vmem:[#allocation5 + $0x38] sm:$0xff]
    %v102 = vld [vmem:[#allocation5 + $0x40] sm:$0xff]
    %v103 = vld [vmem:[#allocation5 + $0x48] sm:$0xff]
    %v104 = vld [vmem:[#allocation5 + $0x50] sm:$0xff]
    %v105 = vld [vmem:[#allocation5 + $0x58] sm:$0xff]
    %v106 = vld [vmem:[#allocation5 + $0x60] sm:$0xff]
    %v107 = vld [vmem:[#allocation5 + $0x68] sm:$0xff]
    %v108 = vld [vmem:[#allocation5 + $0x70] sm:$0xff]
    %v109 = vld [vmem:[#allocation5 + $0x78] sm:$0xff]
    %v110 = vld [vmem:[%s2] sm:$0x1]
    %v112 = vlaneseq
    %v113 = vshrl.u32 %v112, 7
    %v114 = vsub.s32 0, %v113
    %v115 = vrot.slane %v110, %v114
    %117 = vmatprep.subr.mxu0 0.0
    %118 = vmatpush1.msra.mxu0 %v94
    %119 = vmatprep.subr.mxu0 0.0
    %120 = vmatpush1.msra.mxu0 %v95
    %121 = vmatprep.subr.mxu0 0.0
    %122 = vmatpush1.msra.mxu0 %v96
    %123 = vmatprep.subr.mxu0 0.0
    %124 = vmatpush1.msra.mxu0 %v97
    %125 = vmatprep.subr.mxu0 0.0
    %126 = vmatpush1.msra.mxu0 %v98
    %127 = vmatprep.subr.mxu0 0.0
    %128 = vmatpush1.msra.mxu0 %v99
    %129 = vmatprep.subr.mxu0 0.0
    %130 = vmatpush1.msra.mxu0 %v100
    %131 = vmatprep.subr.mxu0 0.0
    %132 = vmatpush1.msra.mxu0 %v101
    %133 = vmatprep.subr.mxu0 0.0
    %134 = vmatpush1.msra.mxu0 %v102
    %135 = vmatprep.subr.mxu0 0.0
    %136 = vmatpush1.msra.mxu0 %v103
    %137 = vmatprep.subr.mxu0 0.0
    %138 = vmatpush1.msra.mxu0 %v104
    %139 = vmatprep.subr.mxu0 0.0
    %140 = vmatpush1.msra.mxu0 %v105
    %141 = vmatprep.subr.mxu0 0.0
    %142 = vmatpush1.msra.mxu0 %v106
    %143 = vmatprep.subr.mxu0 0.0
    %144 = vmatpush1.msra.mxu0 %v107
    %145 = vmatprep.subr.mxu0 0.0
    %146 = vmatpush1.msra.mxu0 %v108
    %147 = vmatprep.subr.mxu0 0.0
    %148 = vmatpush1.msra.mxu0 %v109
    %149 = vmatprep.subr.mxu0 0.0
    %150 = vmatpush1.msra.mxu0 0.0
    %151 = vmatprep.subr.mxu0 0.0
    %152 = vmatpush1.msra.mxu0 0.0
    %153 = vmatprep.subr.mxu0 0.0
    %154 = vmatpush1.msra.mxu0 0.0
    %155 = vmatprep.subr.mxu0 0.0
    %156 = vmatpush1.msra.mxu0 0.0
    %157 = vmatprep.subr.mxu0 0.0
    %158 = vmatpush1.msra.mxu0 0.0
    %159 = vmatprep.subr.mxu0 0.0
    %160 = vmatpush1.msra.mxu0 0.0
    %161 = vmatprep.subr.mxu0 0.0
    %162 = vmatpush1.msra.mxu0 0.0
    %163 = vmatprep.subr.mxu0 0.0
    %164 = vmatpush1.msra.mxu0 0.0
    %165 = vmatprep.subr.mxu0 0.0
    %166 = vmatpush1.msra.mxu0 0.0
    %167 = vmatprep.subr.mxu0 0.0
    %168 = vmatpush1.msra.mxu0 0.0
    %169 = vmatprep.subr.mxu0 0.0
    %170 = vmatpush1.msra.mxu0 0.0
    %171 = vmatprep.subr.mxu0 0.0
    %172 = vmatpush1.msra.mxu0 0.0
    %173 = vmatprep.subr.mxu0 0.0
    %174 = vmatpush1.msra.mxu0 0.0
    %175 = vmatprep.subr.mxu0 0.0
    %176 = vmatpush1.msra.mxu0 0.0
    %177 = vmatprep.subr.mxu0 0.0
    %178 = vmatpush1.msra.mxu0 0.0
    %179 = vmatprep.subr.mxu0 0.0
    %180 = vmatpush1.msra.mxu0 0.0
    %181 = vmatprep.mubr.f32.mxu0 0.0
    %182 = vmatmul.mubr.f32.gmra.mrb[0].mxu0 %v62
    %v183 = vpop.f32.mrb[0].mxu0
    %v184 = vadd.f32 %v115, %v183
    %v185 = vpop.f32.mrb[0].mxu0
    %186 = vmatprep.mubr.f32.mxu0 0.0
    %187 = vmatmul.mubr.f32.gmra.mrb[0].mxu0 %v63
    %v188 = vpop.f32.mrb[0].mxu0
    %v189 = vadd.f32 %v115, %v188
    %v190 = vpop.f32.mrb[0].mxu0
    %191 = vmatprep.mubr.f32.mxu0 0.0
    %192 = vmatmul.mubr.f32.gmra.mrb[0].mxu0 %v64
    %v193 = vpop.f32.mrb[0].mxu0
    %v194 = vadd.f32 %v115, %v193
    %v195 = vpop.f32.mrb[0].mxu0
    %196 = vmatprep.mubr.f32.mxu0 0.0
    %197 = vmatmul.mubr.f32.gmra.mrb[0].mxu0 %v65
    %v198 = vpop.f32.mrb[0].mxu0
    %v199 = vadd.f32 %v115, %v198
    %v200 = vpop.f32.mrb[0].mxu0
    %201 = vmatprep.mubr.f32.mxu0 0.0
    %202 = vmatmul.mubr.f32.gmra.mrb[0].mxu0 %v66
    %v203 = vpop.f32.mrb[0].mxu0
    %v204 = vadd.f32 %v115, %v203
    %v205 = vpop.f32.mrb[0].mxu0
    %206 = vmatprep.mubr.f32.mxu0 0.0
    %207 = vmatmul.mubr.f32.gmra.mrb[0].mxu0 %v67
    %v208 = vpop.f32.mrb[0].mxu0
    %v209 = vadd.f32 %v115, %v208
    %v210 = vpop.f32.mrb[0].mxu0
    %211 = vmatprep.mubr.f32.mxu0 0.0
    %212 = vmatmul.mubr.f32.gmra.mrb[0].mxu0 %v68
    %v213 = vpop.f32.mrb[0].mxu0
    %v214 = vadd.f32 %v115, %v213
    %v215 = vpop.f32.mrb[0].mxu0
    %216 = vmatprep.mubr.f32.mxu0 0.0
    %217 = vmatmul.mubr.f32.gmra.mrb[0].mxu0 %v69
    %v218 = vpop.f32.mrb[0].mxu0
    %v219 = vadd.f32 %v115, %v218
    %v220 = vpop.f32.mrb[0].mxu0
    %221 = vmatprep.mubr.f32.mxu0 0.0
    %222 = vmatmul.mubr.f32.gmra.mrb[0].mxu0 %v70
    %v223 = vpop.f32.mrb[0].mxu0
    %v224 = vadd.f32 %v115, %v223
    %v225 = vpop.f32.mrb[0].mxu0
    %226 = vmatprep.mubr.f32.mxu0 0.0
    %227 = vmatmul.mubr.f32.gmra.mrb[0].mxu0 %v71
    %v228 = vpop.f32.mrb[0].mxu0
    %v229 = vadd.f32 %v115, %v228
    %v230 = vpop.f32.mrb[0].mxu0
    %231 = vmatprep.mubr.f32.mxu0 0.0
    %232 = vmatmul.mubr.f32.gmra.mrb[0].mxu0 %v72
    %v233 = vpop.f32.mrb[0].mxu0
    %v234 = vadd.f32 %v115, %v233
    %v235 = vpop.f32.mrb[0].mxu0
    %236 = vmatprep.mubr.f32.mxu0 0.0
    %237 = vmatmul.mubr.f32.gmra.mrb[0].mxu0 %v73
    %v238 = vpop.f32.mrb[0].mxu0
    %v239 = vadd.f32 %v115, %v238
    %v240 = vpop.f32.mrb[0].mxu0
    %241 = vmatprep.mubr.f32.mxu0 0.0
    %242 = vmatmul.mubr.f32.gmra.mrb[0].mxu0 %v74
    %v243 = vpop.f32.mrb[0].mxu0
    %v244 = vadd.f32 %v115, %v243
    %v245 = vpop.f32.mrb[0].mxu0
    %246 = vmatprep.mubr.f32.mxu0 0.0
    %247 = vmatmul.mubr.f32.gmra.mrb[0].mxu0 %v75
    %v248 = vpop.f32.mrb[0].mxu0
    %v249 = vadd.f32 %v115, %v248
    %v250 = vpop.f32.mrb[0].mxu0
    %251 = vmatprep.mubr.f32.mxu0 0.0
    %252 = vmatmul.mubr.f32.gmra.mrb[0].mxu0 %v76
    %v253 = vpop.f32.mrb[0].mxu0
    %v254 = vadd.f32 %v115, %v253
    %v255 = vpop.f32.mrb[0].mxu0
    %256 = vmatprep.mubr.f32.mxu0 0.0
    %257 = vmatmul.mubr.f32.gmra.mrb[0].mxu0 %v77
    %v258 = vpop.f32.mrb[0].mxu0
    %v259 = vadd.f32 %v115, %v258
    %v260 = vpop.f32.mrb[0].mxu0
    %261 = vmatprep.mubr.f32.mxu0 0.0
    %262 = vmatmul.mubr.f32.gmra.mrb[0].mxu0 %v78
    %v263 = vpop.f32.mrb[0].mxu0
    %v264 = vadd.f32 %v115, %v263
    %v265 = vpop.f32.mrb[0].mxu0
    %266 = vmatprep.mubr.f32.mxu0 0.0
    %267 = vmatmul.mubr.f32.gmra.mrb[0].mxu0 %v79
    %v268 = vpop.f32.mrb[0].mxu0
    %v269 = vadd.f32 %v115, %v268
    %v270 = vpop.f32.mrb[0].mxu0
    %271 = vmatprep.mubr.f32.mxu0 0.0
    %272 = vmatmul.mubr.f32.gmra.mrb[0].mxu0 %v80
    %v273 = vpop.f32.mrb[0].mxu0
    %v274 = vadd.f32 %v115, %v273
    %v275 = vpop.f32.mrb[0].mxu0
    %276 = vmatprep.mubr.f32.mxu0 0.0
    %277 = vmatmul.mubr.f32.gmra.mrb[0].mxu0 %v81
    %v278 = vpop.f32.mrb[0].mxu0
    %v279 = vadd.f32 %v115, %v278
    %v280 = vpop.f32.mrb[0].mxu0
    %281 = vmatprep.mubr.f32.mxu0 0.0
    %282 = vmatmul.mubr.f32.gmra.mrb[0].mxu0 %v82
    %v283 = vpop.f32.mrb[0].mxu0
    %v284 = vadd.f32 %v115, %v283
    %v285 = vpop.f32.mrb[0].mxu0
    %286 = vmatprep.mubr.f32.mxu0 0.0
    %287 = vmatmul.mubr.f32.gmra.mrb[0].mxu0 %v83
    %v288 = vpop.f32.mrb[0].mxu0
    %v289 = vadd.f32 %v115, %v288
    %v290 = vpop.f32.mrb[0].mxu0
    %291 = vmatprep.mubr.f32.mxu0 0.0
    %292 = vmatmul.mubr.f32.gmra.mrb[0].mxu0 %v84
    %v293 = vpop.f32.mrb[0].mxu0
    %v294 = vadd.f32 %v115, %v293
    %v295 = vpop.f32.mrb[0].mxu0
    %296 = vmatprep.mubr.f32.mxu0 0.0
    %297 = vmatmul.mubr.f32.gmra.mrb[0].mxu0 %v85
    %v298 = vpop.f32.mrb[0].mxu0
    %v299 = vadd.f32 %v115, %v298
    %v300 = vpop.f32.mrb[0].mxu0
    %301 = vmatprep.mubr.f32.mxu0 0.0
    %302 = vmatmul.mubr.f32.gmra.mrb[0].mxu0 %v86
    %v303 = vpop.f32.mrb[0].mxu0
    %v304 = vadd.f32 %v115, %v303
    %v305 = vpop.f32.mrb[0].mxu0
    %306 = vmatprep.mubr.f32.mxu0 0.0
    %307 = vmatmul.mubr.f32.gmra.mrb[0].mxu0 %v87
    %v308 = vpop.f32.mrb[0].mxu0
    %v309 = vadd.f32 %v115, %v308
    %v310 = vpop.f32.mrb[0].mxu0
    %311 = vmatprep.mubr.f32.mxu0 0.0
    %312 = vmatmul.mubr.f32.gmra.mrb[0].mxu0 %v88
    %v313 = vpop.f32.mrb[0].mxu0
    %v314 = vadd.f32 %v115, %v313
    %v315 = vpop.f32.mrb[0].mxu0
    %316 = vmatprep.mubr.f32.mxu0 0.0
    %317 = vmatmul.mubr.f32.gmra.mrb[0].mxu0 %v89
    %v318 = vpop.f32.mrb[0].mxu0
    %v319 = vadd.f32 %v115, %v318
    %v320 = vpop.f32.mrb[0].mxu0
    %321 = vmatprep.mubr.f32.mxu0 0.0
    %322 = vmatmul.mubr.f32.gmra.mrb[0].mxu0 %v90
    %v323 = vpop.f32.mrb[0].mxu0
    %v324 = vadd.f32 %v115, %v323
    %v325 = vpop.f32.mrb[0].mxu0
    %326 = vmatprep.mubr.f32.mxu0 0.0
    %327 = vmatmul.mubr.f32.gmra.mrb[0].mxu0 %v91
    %v328 = vpop.f32.mrb[0].mxu0
    %v329 = vadd.f32 %v115, %v328
    %v330 = vpop.f32.mrb[0].mxu0
    %331 = vmatprep.mubr.f32.mxu0 0.0
    %332 = vmatmul.mubr.f32.gmra.mrb[0].mxu0 %v92
    %v333 = vpop.f32.mrb[0].mxu0
    %v334 = vadd.f32 %v115, %v333
    %v335 = vpop.f32.mrb[0].mxu0
    %336 = vmatprep.mubr.f32.mxu0 0.0
    %337 = vmatmul.mubr.f32.gmra.mrb[0].mxu0 %v93
    %v338 = vpop.f32.mrb[0].mxu0
    %v339 = vadd.f32 %v115, %v338
    %v340 = vpop.f32.mrb[0].mxu0
    %341 = vdwg.mxu0
    %v342 = vmax.f32 %v184, 0.0
    %v343 = vmax.f32 %v189, 0.0
    %v344 = vmax.f32 %v194, 0.0
    %v345 = vmax.f32 %v199, 0.0
    %v346 = vmax.f32 %v204, 0.0
    %v347 = vmax.f32 %v209, 0.0
    %v348 = vmax.f32 %v214, 0.0
    %v349 = vmax.f32 %v219, 0.0
    %v350 = vmax.f32 %v224, 0.0
    %v351 = vmax.f32 %v229, 0.0
    %v352 = vmax.f32 %v234, 0.0
    %v353 = vmax.f32 %v239, 0.0
    %v354 = vmax.f32 %v244, 0.0
    %v355 = vmax.f32 %v249, 0.0
    %v356 = vmax.f32 %v254, 0.0
    %v357 = vmax.f32 %v259, 0.0
    %v358 = vmax.f32 %v264, 0.0
    %v359 = vmax.f32 %v269, 0.0
    %v360 = vmax.f32 %v274, 0.0
    %v361 = vmax.f32 %v279, 0.0
    %v362 = vmax.f32 %v284, 0.0
    %v363 = vmax.f32 %v289, 0.0
    %v364 = vmax.f32 %v294, 0.0
    %v365 = vmax.f32 %v299, 0.0
    %v366 = vmax.f32 %v304, 0.0
    %v367 = vmax.f32 %v309, 0.0
    %v368 = vmax.f32 %v314, 0.0
    %v369 = vmax.f32 %v319, 0.0
    %v370 = vmax.f32 %v324, 0.0
    %v371 = vmax.f32 %v329, 0.0
    %v372 = vmax.f32 %v334, 0.0
    %v373 = vmax.f32 %v339, 0.0
    %v374 = vld [vmem:[#allocation7] sm:$0xff]
    %v375 = vld [vmem:[#allocation7 + $0x8] sm:$0xff]
    %v376 = vld [vmem:[#allocation7 + $0x10] sm:$0xff]
    %v377 = vld [vmem:[#allocation7 + $0x18] sm:$0xff]
    %v378 = vld [vmem:[#allocation7 + $0x20] sm:$0xff]
    %v379 = vld [vmem:[#allocation7 + $0x28] sm:$0xff]
    %v380 = vld [vmem:[#allocation7 + $0x30] sm:$0xff]
    %v381 = vld [vmem:[#allocation7 + $0x38] sm:$0xff]
    %v382 = vld [vmem:[#allocation7 + $0x40] sm:$0xff]
    %v383 = vld [vmem:[#allocation7 + $0x48] sm:$0xff]
    %v384 = vld [vmem:[#allocation7 + $0x50] sm:$0xff]
    %v385 = vld [vmem:[#allocation7 + $0x58] sm:$0xff]
    %v386 = vld [vmem:[#allocation7 + $0x60] sm:$0xff]
    %v387 = vld [vmem:[#allocation7 + $0x68] sm:$0xff]
    %v388 = vld [vmem:[#allocation7 + $0x70] sm:$0xff]
    %v389 = vld [vmem:[#allocation7 + $0x78] sm:$0xff]
    %v390 = vld [vmem:[%s4] sm:$0x1]
    %v392 = vlaneseq
    %v393 = vshrl.u32 %v392, 7
    %v394 = vsub.s32 0, %v393
    %v395 = vrot.slane %v390, %v394
    %397 = vmatprep.subr.mxu0 0.0
    %398 = vmatpush1.msra.mxu0 %v374
    %399 = vmatprep.subr.mxu0 0.0
    %400 = vmatpush1.msra.mxu0 %v375
    %401 = vmatprep.subr.mxu0 0.0
    %402 = vmatpush1.msra.mxu0 %v376
    %403 = vmatprep.subr.mxu0 0.0
    %404 = vmatpush1.msra.mxu0 %v377
    %405 = vmatprep.subr.mxu0 0.0
    %406 = vmatpush1.msra.mxu0 %v378
    %407 = vmatprep.subr.mxu0 0.0
    %408 = vmatpush1.msra.mxu0 %v379
    %409 = vmatprep.subr.mxu0 0.0
    %410 = vmatpush1.msra.mxu0 %v380
    %411 = vmatprep.subr.mxu0 0.0
    %412 = vmatpush1.msra.mxu0 %v381
    %413 = vmatprep.subr.mxu0 0.0
    %414 = vmatpush1.msra.mxu0 %v382
    %415 = vmatprep.subr.mxu0 0.0
    %416 = vmatpush1.msra.mxu0 %v383
    %417 = vmatprep.subr.mxu0 0.0
    %418 = vmatpush1.msra.mxu0 %v384
    %419 = vmatprep.subr.mxu0 0.0
    %420 = vmatpush1.msra.mxu0 %v385
    %421 = vmatprep.subr.mxu0 0.0
    %422 = vmatpush1.msra.mxu0 %v386
    %423 = vmatprep.subr.mxu0 0.0
    %424 = vmatpush1.msra.mxu0 %v387
    %425 = vmatprep.subr.mxu0 0.0
    %426 = vmatpush1.msra.mxu0 %v388
    %427 = vmatprep.subr.mxu0 0.0
    %428 = vmatpush1.msra.mxu0 %v389
    %429 = vmatprep.subr.mxu0 0.0
    %430 = vmatpush1.msra.mxu0 0.0
    %431 = vmatprep.subr.mxu0 0.0
    %432 = vmatpush1.msra.mxu0 0.0
    %433 = vmatprep.subr.mxu0 0.0
    %434 = vmatpush1.msra.mxu0 0.0
    %435 = vmatprep.subr.mxu0 0.0
    %436 = vmatpush1.msra.mxu0 0.0
    %437 = vmatprep.subr.mxu0 0.0
    %438 = vmatpush1.msra.mxu0 0.0
    %439 = vmatprep.subr.mxu0 0.0
    %440 = vmatpush1.msra.mxu0 0.0
    %441 = vmatprep.subr.mxu0 0.0
    %442 = vmatpush1.msra.mxu0 0.0
    %443 = vmatprep.subr.mxu0 0.0
    %444 = vmatpush1.msra.mxu0 0.0
    %445 = vmatprep.subr.mxu0 0.0
    %446 = vmatpush1.msra.mxu0 0.0
    %447 = vmatprep.subr.mxu0 0.0
    %448 = vmatpush1.msra.mxu0 0.0
    %449 = vmatprep.subr.mxu0 0.0
    %450 = vmatpush1.msra.mxu0 0.0
    %451 = vmatprep.subr.mxu0 0.0
    %452 = vmatpush1.msra.mxu0 0.0
    %453 = vmatprep.subr.mxu0 0.0
    %454 = vmatpush1.msra.mxu0 0.0
    %455 = vmatprep.subr.mxu0 0.0
    %456 = vmatpush1.msra.mxu0 0.0
    %457 = vmatprep.subr.mxu0 0.0
    %458 = vmatpush1.msra.mxu0 0.0
    %459 = vmatprep.subr.mxu0 0.0
    %460 = vmatpush1.msra.mxu0 0.0
    %461 = vmatprep.mubr.f32.mxu0 0.0
    %462 = vmatmul.mubr.f32.gmra.mrb[0].mxu0 %v342
    %v463 = vpop.f32.mrb[0].mxu0
    %v464 = vadd.f32 %v395, %v463
    %v465 = vpop.f32.mrb[0].mxu0
    %466 = vmatprep.mubr.f32.mxu0 0.0
    %467 = vmatmul.mubr.f32.gmra.mrb[0].mxu0 %v343
    %v468 = vpop.f32.mrb[0].mxu0
    %v469 = vadd.f32 %v395, %v468
    %v470 = vpop.f32.mrb[0].mxu0
    %471 = vmatprep.mubr.f32.mxu0 0.0
    %472 = vmatmul.mubr.f32.gmra.mrb[0].mxu0 %v344
    %v473 = vpop.f32.mrb[0].mxu0
    %v474 = vadd.f32 %v395, %v473
    %v475 = vpop.f32.mrb[0].mxu0
    %476 = vmatprep.mubr.f32.mxu0 0.0
    %477 = vmatmul.mubr.f32.gmra.mrb[0].mxu0 %v345
    %v478 = vpop.f32.mrb[0].mxu0
    %v479 = vadd.f32 %v395, %v478
    %v480 = vpop.f32.mrb[0].mxu0
    %481 = vmatprep.mubr.f32.mxu0 0.0
    %482 = vmatmul.mubr.f32.gmra.mrb[0].mxu0 %v346
    %v483 = vpop.f32.mrb[0].mxu0
    %v484 = vadd.f32 %v395, %v483
    %v485 = vpop.f32.mrb[0].mxu0
    %486 = vmatprep.mubr.f32.mxu0 0.0
    %487 = vmatmul.mubr.f32.gmra.mrb[0].mxu0 %v347
    %v488 = vpop.f32.mrb[0].mxu0
    %v489 = vadd.f32 %v395, %v488
    %v490 = vpop.f32.mrb[0].mxu0
    %491 = vmatprep.mubr.f32.mxu0 0.0
    %492 = vmatmul.mubr.f32.gmra.mrb[0].mxu0 %v348
    %v493 = vpop.f32.mrb[0].mxu0
    %v494 = vadd.f32 %v395, %v493
    %v495 = vpop.f32.mrb[0].mxu0
    %496 = vmatprep.mubr.f32.mxu0 0.0
    %497 = vmatmul.mubr.f32.gmra.mrb[0].mxu0 %v349
    %v498 = vpop.f32.mrb[0].mxu0
    %v499 = vadd.f32 %v395, %v498
    %v500 = vpop.f32.mrb[0].mxu0
    %501 = vmatprep.mubr.f32.mxu0 0.0
    %502 = vmatmul.mubr.f32.gmra.mrb[0].mxu0 %v350
    %v503 = vpop.f32.mrb[0].mxu0
    %v504 = vadd.f32 %v395, %v503
    %v505 = vpop.f32.mrb[0].mxu0
    %506 = vmatprep.mubr.f32.mxu0 0.0
    %507 = vmatmul.mubr.f32.gmra.mrb[0].mxu0 %v351
    %v508 = vpop.f32.mrb[0].mxu0
    %v509 = vadd.f32 %v395, %v508
    %v510 = vpop.f32.mrb[0].mxu0
    %511 = vmatprep.mubr.f32.mxu0 0.0
    %512 = vmatmul.mubr.f32.gmra.mrb[0].mxu0 %v352
    %v513 = vpop.f32.mrb[0].mxu0
    %v514 = vadd.f32 %v395, %v513
    %v515 = vpop.f32.mrb[0].mxu0
    %516 = vmatprep.mubr.f32.mxu0 0.0
    %517 = vmatmul.mubr.f32.gmra.mrb[0].mxu0 %v353
    %v518 = vpop.f32.mrb[0].mxu0
    %v519 = vadd.f32 %v395, %v518
    %v520 = vpop.f32.mrb[0].mxu0
    %521 = vmatprep.mubr.f32.mxu0 0.0
    %522 = vmatmul.mubr.f32.gmra.mrb[0].mxu0 %v354
    %v523 = vpop.f32.mrb[0].mxu0
    %v524 = vadd.f32 %v395, %v523
    %v525 = vpop.f32.mrb[0].mxu0
    %526 = vmatprep.mubr.f32.mxu0 0.0
    %527 = vmatmul.mubr.f32.gmra.mrb[0].mxu0 %v355
    %v528 = vpop.f32.mrb[0].mxu0
    %v529 = vadd.f32 %v395, %v528
    %v530 = vpop.f32.mrb[0].mxu0
    %531 = vmatprep.mubr.f32.mxu0 0.0
    %532 = vmatmul.mubr.f32.gmra.mrb[0].mxu0 %v356
    %v533 = vpop.f32.mrb[0].mxu0
    %v534 = vadd.f32 %v395, %v533
    %v535 = vpop.f32.mrb[0].mxu0
    %536 = vmatprep.mubr.f32.mxu0 0.0
    %537 = vmatmul.mubr.f32.gmra.mrb[0].mxu0 %v357
    %v538 = vpop.f32.mrb[0].mxu0
    %v539 = vadd.f32 %v395, %v538
    %v540 = vpop.f32.mrb[0].mxu0
    %541 = vmatprep.mubr.f32.mxu0 0.0
    %542 = vmatmul.mubr.f32.gmra.mrb[0].mxu0 %v358
    %v543 = vpop.f32.mrb[0].mxu0
    %v544 = vadd.f32 %v395, %v543
    %v545 = vpop.f32.mrb[0].mxu0
    %546 = vmatprep.mubr.f32.mxu0 0.0
    %547 = vmatmul.mubr.f32.gmra.mrb[0].mxu0 %v359
    %v548 = vpop.f32.mrb[0].mxu0
    %v549 = vadd.f32 %v395, %v548
    %v550 = vpop.f32.mrb[0].mxu0
    %551 = vmatprep.mubr.f32.mxu0 0.0
    %552 = vmatmul.mubr.f32.gmra.mrb[0].mxu0 %v360
    %v553 = vpop.f32.mrb[0].mxu0
    %v554 = vadd.f32 %v395, %v553
    %v555 = vpop.f32.mrb[0].mxu0
    %556 = vmatprep.mubr.f32.mxu0 0.0
    %557 = vmatmul.mubr.f32.gmra.mrb[0].mxu0 %v361
    %v558 = vpop.f32.mrb[0].mxu0
    %v559 = vadd.f32 %v395, %v558
    %v560 = vpop.f32.mrb[0].mxu0
    %561 = vmatprep.mubr.f32.mxu0 0.0
    %562 = vmatmul.mubr.f32.gmra.mrb[0].mxu0 %v362
    %v563 = vpop.f32.mrb[0].mxu0
    %v564 = vadd.f32 %v395, %v563
    %v565 = vpop.f32.mrb[0].mxu0
    %566 = vmatprep.mubr.f32.mxu0 0.0
    %567 = vmatmul.mubr.f32.gmra.mrb[0].mxu0 %v363
    %v568 = vpop.f32.mrb[0].mxu0
    %v569 = vadd.f32 %v395, %v568
    %v570 = vpop.f32.mrb[0].mxu0
    %571 = vmatprep.mubr.f32.mxu0 0.0
    %572 = vmatmul.mubr.f32.gmra.mrb[0].mxu0 %v364
    %v573 = vpop.f32.mrb[0].mxu0
    %v574 = vadd.f32 %v395, %v573
    %v575 = vpop.f32.mrb[0].mxu0
    %576 = vmatprep.mubr.f32.mxu0 0.0
    %577 = vmatmul.mubr.f32.gmra.mrb[0].mxu0 %v365
    %v578 = vpop.f32.mrb[0].mxu0
    %v579 = vadd.f32 %v395, %v578
    %v580 = vpop.f32.mrb[0].mxu0
    %581 = vmatprep.mubr.f32.mxu0 0.0
    %582 = vmatmul.mubr.f32.gmra.mrb[0].mxu0 %v366
    %v583 = vpop.f32.mrb[0].mxu0
    %v584 = vadd.f32 %v395, %v583
    %v585 = vpop.f32.mrb[0].mxu0
    %586 = vmatprep.mubr.f32.mxu0 0.0
    %587 = vmatmul.mubr.f32.gmra.mrb[0].mxu0 %v367
    %v588 = vpop.f32.mrb[0].mxu0
    %v589 = vadd.f32 %v395, %v588
    %v590 = vpop.f32.mrb[0].mxu0
    %591 = vmatprep.mubr.f32.mxu0 0.0
    %592 = vmatmul.mubr.f32.gmra.mrb[0].mxu0 %v368
    %v593 = vpop.f32.mrb[0].mxu0
    %v594 = vadd.f32 %v395, %v593
    %v595 = vpop.f32.mrb[0].mxu0
    %596 = vmatprep.mubr.f32.mxu0 0.0
    %597 = vmatmul.mubr.f32.gmra.mrb[0].mxu0 %v369
    %v598 = vpop.f32.mrb[0].mxu0
    %v599 = vadd.f32 %v395, %v598
    %v600 = vpop.f32.mrb[0].mxu0
    %601 = vmatprep.mubr.f32.mxu0 0.0
    %602 = vmatmul.mubr.f32.gmra.mrb[0].mxu0 %v370
    %v603 = vpop.f32.mrb[0].mxu0
    %v604 = vadd.f32 %v395, %v603
    %v605 = vpop.f32.mrb[0].mxu0
    %606 = vmatprep.mubr.f32.mxu0 0.0
    %607 = vmatmul.mubr.f32.gmra.mrb[0].mxu0 %v371
    %v608 = vpop.f32.mrb[0].mxu0
    %v609 = vadd.f32 %v395, %v608
    %v610 = vpop.f32.mrb[0].mxu0
    %611 = vmatprep.mubr.f32.mxu0 0.0
    %612 = vmatmul.mubr.f32.gmra.mrb[0].mxu0 %v372
    %v613 = vpop.f32.mrb[0].mxu0
    %v614 = vadd.f32 %v395, %v613
    %v615 = vpop.f32.mrb[0].mxu0
    %616 = vmatprep.mubr.f32.mxu0 0.0
    %617 = vmatmul.mubr.f32.gmra.mrb[0].mxu0 %v373
    %v618 = vpop.f32.mrb[0].mxu0
    %v619 = vadd.f32 %v395, %v618
    %v620 = vpop.f32.mrb[0].mxu0
    %621 = vdwg.mxu0
    %v622 = vmax.f32 %v464, 0.0
    %v623 = vmax.f32 %v469, 0.0
    %v624 = vmax.f32 %v474, 0.0
    %v625 = vmax.f32 %v479, 0.0
    %v626 = vmax.f32 %v484, 0.0
    %v627 = vmax.f32 %v489, 0.0
    %v628 = vmax.f32 %v494, 0.0
    %v629 = vmax.f32 %v499, 0.0
    %v630 = vmax.f32 %v504, 0.0
    %v631 = vmax.f32 %v509, 0.0
    %v632 = vmax.f32 %v514, 0.0
    %v633 = vmax.f32 %v519, 0.0
    %v634 = vmax.f32 %v524, 0.0
    %v635 = vmax.f32 %v529, 0.0
    %v636 = vmax.f32 %v534, 0.0
    %v637 = vmax.f32 %v539, 0.0
    %v638 = vmax.f32 %v544, 0.0
    %v639 = vmax.f32 %v549, 0.0
    %v640 = vmax.f32 %v554, 0.0
    %v641 = vmax.f32 %v559, 0.0
    %v642 = vmax.f32 %v564, 0.0
    %v643 = vmax.f32 %v569, 0.0
    %v644 = vmax.f32 %v574, 0.0
    %v645 = vmax.f32 %v579, 0.0
    %v646 = vmax.f32 %v584, 0.0
    %v647 = vmax.f32 %v589, 0.0
    %v648 = vmax.f32 %v594, 0.0
    %v649 = vmax.f32 %v599, 0.0
    %v650 = vmax.f32 %v604, 0.0
    %v651 = vmax.f32 %v609, 0.0
    %v652 = vmax.f32 %v614, 0.0
    %v653 = vmax.f32 %v619, 0.0
    %v654 = vrot.slane %v622, 4
    %v655 = vmax.f32 %v622, %v654
    %v656 = vrot.slane %v655, 2
    %v657 = vmax.f32 %v655, %v656
    %v658 = vrot.slane %v657, 1
    %v659 = vmax.f32 %v657, %v658
    %v660 = vrot.slane %v623, 4
    %v661 = vmax.f32 %v623, %v660
    %v662 = vrot.slane %v661, 2
    %v663 = vmax.f32 %v661, %v662
    %v664 = vrot.slane %v663, 1
    %v665 = vmax.f32 %v663, %v664
    %v666 = vrot.slane %v624, 4
    %v667 = vmax.f32 %v624, %v666
    %v668 = vrot.slane %v667, 2
    %v669 = vmax.f32 %v667, %v668
    %v670 = vrot.slane %v669, 1
    %v671 = vmax.f32 %v669, %v670
    %v672 = vrot.slane %v625, 4
    %v673 = vmax.f32 %v625, %v672
    %v674 = vrot.slane %v673, 2
    %v675 = vmax.f32 %v673, %v674
    %v676 = vrot.slane %v675, 1
    %v677 = vmax.f32 %v675, %v676
    %v678 = vrot.slane %v626, 4
    %v679 = vmax.f32 %v626, %v678
    %v680 = vrot.slane %v679, 2
    %v681 = vmax.f32 %v679, %v680
    %v682 = vrot.slane %v681, 1
    %v683 = vmax.f32 %v681, %v682
    %v684 = vrot.slane %v627, 4
    %v685 = vmax.f32 %v627, %v684
    %v686 = vrot.slane %v685, 2
    %v687 = vmax.f32 %v685, %v686
    %v688 = vrot.slane %v687, 1
    %v689 = vmax.f32 %v687, %v688
    %v690 = vrot.slane %v628, 4
    %v691 = vmax.f32 %v628, %v690
    %v692 = vrot.slane %v691, 2
    %v693 = vmax.f32 %v691, %v692
    %v694 = vrot.slane %v693, 1
    %v695 = vmax.f32 %v693, %v694
    %v696 = vrot.slane %v629, 4
    %v697 = vmax.f32 %v629, %v696
    %v698 = vrot.slane %v697, 2
    %v699 = vmax.f32 %v697, %v698
    %v700 = vrot.slane %v699, 1
    %v701 = vmax.f32 %v699, %v700
    %v702 = vrot.slane %v630, 4
    %v703 = vmax.f32 %v630, %v702
    %v704 = vrot.slane %v703, 2
    %v705 = vmax.f32 %v703, %v704
    %v706 = vrot.slane %v705, 1
    %v707 = vmax.f32 %v705, %v706
    %v708 = vrot.slane %v631, 4
    %v709 = vmax.f32 %v631, %v708
    %v710 = vrot.slane %v709, 2
    %v711 = vmax.f32 %v709, %v710
    %v712 = vrot.slane %v711, 1
    %v713 = vmax.f32 %v711, %v712
    %v714 = vrot.slane %v632, 4
    %v715 = vmax.f32 %v632, %v714
    %v716 = vrot.slane %v715, 2
    %v717 = vmax.f32 %v715, %v716
    %v718 = vrot.slane %v717, 1
    %v719 = vmax.f32 %v717, %v718
    %v720 = vrot.slane %v633, 4
    %v721 = vmax.f32 %v633, %v720
    %v722 = vrot.slane %v721, 2
    %v723 = vmax.f32 %v721, %v722
    %v724 = vrot.slane %v723, 1
    %v725 = vmax.f32 %v723, %v724
    %v726 = vrot.slane %v634, 4
    %v727 = vmax.f32 %v634, %v726
    %v728 = vrot.slane %v727, 2
    %v729 = vmax.f32 %v727, %v728
    %v730 = vrot.slane %v729, 1
    %v731 = vmax.f32 %v729, %v730
    %v732 = vrot.slane %v635, 4
    %v733 = vmax.f32 %v635, %v732
    %v734 = vrot.slane %v733, 2
    %v735 = vmax.f32 %v733, %v734
    %v736 = vrot.slane %v735, 1
    %v737 = vmax.f32 %v735, %v736
    %v738 = vrot.slane %v636, 4
    %v739 = vmax.f32 %v636, %v738
    %v740 = vrot.slane %v739, 2
    %v741 = vmax.f32 %v739, %v740
    %v742 = vrot.slane %v741, 1
    %v743 = vmax.f32 %v741, %v742
    %v744 = vrot.slane %v637, 4
    %v745 = vmax.f32 %v637, %v744
    %v746 = vrot.slane %v745, 2
    %v747 = vmax.f32 %v745, %v746
    %v748 = vrot.slane %v747, 1
    %v749 = vmax.f32 %v747, %v748
    %v750 = vrot.slane %v638, 4
    %v751 = vmax.f32 %v638, %v750
    %v752 = vrot.slane %v751, 2
    %v753 = vmax.f32 %v751, %v752
    %v754 = vrot.slane %v753, 1
    %v755 = vmax.f32 %v753, %v754
    %v756 = vrot.slane %v639, 4
    %v757 = vmax.f32 %v639, %v756
    %v758 = vrot.slane %v757, 2
    %v759 = vmax.f32 %v757, %v758
    %v760 = vrot.slane %v759, 1
    %v761 = vmax.f32 %v759, %v760
    %v762 = vrot.slane %v640, 4
    %v763 = vmax.f32 %v640, %v762
    %v764 = vrot.slane %v763, 2
    %v765 = vmax.f32 %v763, %v764
    %v766 = vrot.slane %v765, 1
    %v767 = vmax.f32 %v765, %v766
    %v768 = vrot.slane %v641, 4
    %v769 = vmax.f32 %v641, %v768
    %v770 = vrot.slane %v769, 2
    %v771 = vmax.f32 %v769, %v770
    %v772 = vrot.slane %v771, 1
    %v773 = vmax.f32 %v771, %v772
    %v774 = vrot.slane %v642, 4
    %v775 = vmax.f32 %v642, %v774
    %v776 = vrot.slane %v775, 2
    %v777 = vmax.f32 %v775, %v776
    %v778 = vrot.slane %v777, 1
    %v779 = vmax.f32 %v777, %v778
    %v780 = vrot.slane %v643, 4
    %v781 = vmax.f32 %v643, %v780
    %v782 = vrot.slane %v781, 2
    %v783 = vmax.f32 %v781, %v782
    %v784 = vrot.slane %v783, 1
    %v785 = vmax.f32 %v783, %v784
    %v786 = vrot.slane %v644, 4
    %v787 = vmax.f32 %v644, %v786
    %v788 = vrot.slane %v787, 2
    %v789 = vmax.f32 %v787, %v788
    %v790 = vrot.slane %v789, 1
    %v791 = vmax.f32 %v789, %v790
    %v792 = vrot.slane %v645, 4
    %v793 = vmax.f32 %v645, %v792
    %v794 = vrot.slane %v793, 2
    %v795 = vmax.f32 %v793, %v794
    %v796 = vrot.slane %v795, 1
    %v797 = vmax.f32 %v795, %v796
    %v798 = vrot.slane %v646, 4
    %v799 = vmax.f32 %v646, %v798
    %v800 = vrot.slane %v799, 2
    %v801 = vmax.f32 %v799, %v800
    %v802 = vrot.slane %v801, 1
    %v803 = vmax.f32 %v801, %v802
    %v804 = vrot.slane %v647, 4
    %v805 = vmax.f32 %v647, %v804
    %v806 = vrot.slane %v805, 2
    %v807 = vmax.f32 %v805, %v806
    %v808 = vrot.slane %v807, 1
    %v809 = vmax.f32 %v807, %v808
    %v810 = vrot.slane %v648, 4
    %v811 = vmax.f32 %v648, %v810
    %v812 = vrot.slane %v811, 2
    %v813 = vmax.f32 %v811, %v812
    %v814 = vrot.slane %v813, 1
    %v815 = vmax.f32 %v813, %v814
    %v816 = vrot.slane %v649, 4
    %v817 = vmax.f32 %v649, %v816
    %v818 = vrot.slane %v817, 2
    %v819 = vmax.f32 %v817, %v818
    %v820 = vrot.slane %v819, 1
    %v821 = vmax.f32 %v819, %v820
    %v822 = vrot.slane %v650, 4
    %v823 = vmax.f32 %v650, %v822
    %v824 = vrot.slane %v823, 2
    %v825 = vmax.f32 %v823, %v824
    %v826 = vrot.slane %v825, 1
    %v827 = vmax.f32 %v825, %v826
    %v828 = vrot.slane %v651, 4
    %v829 = vmax.f32 %v651, %v828
    %v830 = vrot.slane %v829, 2
    %v831 = vmax.f32 %v829, %v830
    %v832 = vrot.slane %v831, 1
    %v833 = vmax.f32 %v831, %v832
    %v834 = vrot.slane %v652, 4
    %v835 = vmax.f32 %v652, %v834
    %v836 = vrot.slane %v835, 2
    %v837 = vmax.f32 %v835, %v836
    %v838 = vrot.slane %v837, 1
    %v839 = vmax.f32 %v837, %v838
    %v840 = vrot.slane %v653, 4
    %v841 = vmax.f32 %v653, %v840
    %v842 = vrot.slane %v841, 2
    %v843 = vmax.f32 %v841, %v842
    %v844 = vrot.slane %v843, 1
    %v845 = vmax.f32 %v843, %v844
    %vm878 = vcmask 1041409
    %v879 = vsel %vm878, %v665, %v659
    %vm880 = vcmask 1042434
    %v881 = vsel %vm880, %v671, %v879
    %vm882 = vcmask 1043459
    %v883 = vsel %vm882, %v677, %v881
    %vm884 = vcmask 1044484
    %v885 = vsel %vm884, %v683, %v883
    %vm886 = vcmask 1045509
    %v887 = vsel %vm886, %v689, %v885
    %vm888 = vcmask 1046534
    %v889 = vsel %vm888, %v695, %v887
    %vm890 = vcmask 1047559
    %v891 = vsel %vm890, %v701, %v889
    %v892 = vsel %vm878, %v713, %v707
    %v893 = vsel %vm880, %v719, %v892
    %v894 = vsel %vm882, %v725, %v893
    %v895 = vsel %vm884, %v731, %v894
    %v896 = vsel %vm886, %v737, %v895
    %v897 = vsel %vm888, %v743, %v896
    %v898 = vsel %vm890, %v749, %v897
    %v899 = vsel %vm878, %v761, %v755
    %v900 = vsel %vm880, %v767, %v899
    %v901 = vsel %vm882, %v773, %v900
    %v902 = vsel %vm884, %v779, %v901
    %v903 = vsel %vm886, %v785, %v902
    %v904 = vsel %vm888, %v791, %v903
    %v905 = vsel %vm890, %v797, %v904
    %v906 = vsel %vm878, %v809, %v803
    %v907 = vsel %vm880, %v815, %v906
    %v908 = vsel %vm882, %v821, %v907
    %v909 = vsel %vm884, %v827, %v908
    %v910 = vsel %vm886, %v833, %v909
    %v911 = vsel %vm888, %v839, %v910
    %v912 = vsel %vm890, %v845, %v911
    %917 = vst [vmem:[#allocation8] sm:$0xff] %v891
    %918 = vst [vmem:[#allocation8 + $0x8] sm:$0xff] %v898
    %919 = vst [vmem:[#allocation8 + $0x10] sm:$0xff] %v905
    %920 = vst [vmem:[#allocation8 + $0x18] sm:$0xff] %v912
    // Predicated region
    $region34: #{tpu_custom_call.1} parent=1 // pred_check
      _
    $region35: #{tpu_custom_call.1} parent=1 // pred_check_branch
      %922 = sbr.rel (0) target = $region37
    $region36: #{tpu_custom_call.1} parent=1 // pred_region
      %s924 = ssub.s32 512, 512
      %925 = vsyncadd [#allocation4], %s924
      %s926 = sshll.u32 [#allocation8], 4
      %s927 = int_to_ptr.vmem [resolvable:$true] %s926
      %932 = dma.vmem_to_hbm [thread:$0]  %s927, 512, %s5, [#allocation4], 128, 128, 8
    $region37: #{tpu_custom_call.1} parent=1 // pred_fallthru
      _
    // Predicated region
    $region38: #{tpu_custom_call.1} parent=1 // pred_check
      _
    $region39: #{tpu_custom_call.1} parent=1 // pred_check_branch
      %934 = sbr.rel (0) target = $region41
    $region40: #{tpu_custom_call.1} parent=1 // pred_region
      %935 = dma.done [#allocation4], 512
    $region41: #{tpu_custom_call.1} parent=1 // pred_fallthru
      _
    %936 = vsyncpa [#allocation3], 1
    %937 = vsyncpa [#allocation6], 1
    %938 = vsyncpa [#allocation4], 1

</llo_original>
